<compile_context>
chip_gen: v7x
topology: tpu7x:2x2x1
jax: 0.10.0
libtpu: 0.0.40
codegen_flags: <defaults>
</compile_context>

<pallas_src>
import jax
import jax.numpy as jnp
from jax import lax
from jax.experimental import pallas as pl
from jax.experimental.pallas import tpu as pltpu

_LANE = 128
_SUBLANE = 8


def _round_up(x, m):
    return ((x + m - 1) // m) * m


def _pick_tile_h(H, row_len, tco, *, target_rows=512, max_acc_bytes=8 << 20):
    """Pick an H tile (divisor of H): smallest tile whose matmul M = TH*row_len reaches
    `target_rows`, capped so the f32 accumulator (M, tco) stays within budget."""
    best = 1
    for d in range(1, H + 1):
        if H % d:
            continue
        if d * row_len * tco * 4 > max_acc_bytes:
            break
        best = d
        if d * row_len >= target_rows:
            break
    return best


# ------------------------------ Pallas kernels ------------------------------ #

def _gemm_bias_relu_kernel(x_ref, w_ref, b_ref, o_ref):
    """Small-Cin path: x_ref (1, TH, W, 128) holds im2col patches (9 taps folded into
    the K dimension) -> one dense MXU matmul + bias + ReLU per tile."""
    _, TH, W, Kp = x_ref.shape
    TCo = o_ref.shape[3]
    lhs = x_ref[0].reshape(TH * W, Kp)                       # lane-dense, contiguous
    acc = jnp.dot(lhs, w_ref[...], preferred_element_type=jnp.float32)
    out = jnp.maximum(acc + b_ref[...], 0.0)                 # f32 bias + ReLU
    o_ref[0] = out.reshape(TH, W, TCo).astype(o_ref.dtype)   # bf16, 128-lane store


def _conv3x3_slab_kernel(x_ref, w_ref, b_ref, o_ref):
    """General (lane-dense Cin) path.

    x_ref: (1, H+3, Wp2, Cip)  spatially padded image (bf16); index-invariant along the
                               h / co grid axes, so it is DMA'd once per image.
    w_ref: (3, 3*Cip, TCo)     fused 3x3 kernel, kh-major, rows ordered (kw, ci) (bf16).
    b_ref: (1, TCo)            fused bias (f32).
    o_ref: (1, TH, W, TCo)     output tile (bf16).
    """
    _, TH, W, TCo = o_ref.shape
    Wp2 = x_ref.shape[2]
    Cip = x_ref.shape[3]
    rows = TH * Wp2

    row0 = pl.multiple_of(pl.program_id(2) * TH, TH)
    # One contiguous halo slab per tile (TH+3 padded rows, full padded width).  Every
    # tap below is a static row-shifted view of this slab -- no strided slice+reshape
    # relayout copies, no masked loads.  (pltpu.roll on the slab is the XLU-native
    # alternative to the shifted views.)
    slab = x_ref[0, pl.ds(row0, TH + 3), :, :].reshape((TH + 3) * Wp2, Cip)

    acc = jnp.zeros((rows, TCo), jnp.float32)
    for kh in range(3):
        base = kh * Wp2
        # kw taps are +0/+1/+2 row shifts in the flattened (row, col) index; any value
        # that crosses a row boundary only lands in the >=W pad columns, which are
        # cropped at the store.  Lane-concat (128-aligned pieces) folds kw into K.
        lhs = jnp.concatenate(
            [slab[base + kw:base + kw + rows] for kw in range(3)], axis=1)
        acc = acc + jnp.dot(lhs, w_ref[kh], preferred_element_type=jnp.float32)

    out = jnp.maximum(acc + b_ref[...], 0.0).reshape(TH, Wp2, TCo)
    o_ref[0] = out[:, :W, :].astype(o_ref.dtype)             # crop pad cols, bf16 store


# --------------------------------- wrappers --------------------------------- #

def _conv_small_cin(x_nhwc, w_hwio, bias, Cop, TCo, compute_dtype, out_dtype):
    N, H, W, Cin = x_nhwc.shape
    Cout = w_hwio.shape[-1]
    K = 9 * Cin

    # Fold the 3x3 neighbourhood into channels (im2col).  For 9*Cin <= 128 this costs
    # no more HBM bytes than lane-padding Cin to 128 would, and it removes the ~32x
    # zero-padding waste in the matmul K dimension (one matmul per tile).
    xp = jnp.pad(x_nhwc, ((0, 0), (1, 1), (1, 1), (0, 0)))
    taps = [xp[:, kh:kh + H, kw:kw + W, :] for kh in range(3) for kw in range(3)]
    patches = jnp.concatenate(taps, axis=-1)                       # (N, H, W, 9*Cin)
    patches = jnp.pad(patches, ((0, 0), (0, 0), (0, 0), (0, _LANE - K)))
    patches = patches.astype(compute_dtype)

    wmat = w_hwio.reshape(K, Cout)                                 # (kh,kw,ci)-major rows
    wmat = jnp.pad(wmat, ((0, _LANE - K), (0, Cop - Cout))).astype(compute_dtype)
    b2 = jnp.pad(bias, (0, Cop - Cout)).reshape(1, Cop).astype(jnp.float32)

    TH = _pick_tile_h(H, W, TCo)
    grid = (N, Cop // TCo, H // TH)

    cost = pl.CostEstimate(
        flops=2 * N * H * W * _LANE * Cop, transcendentals=0,
        bytes_accessed=patches.size * 2 + wmat.size * 2 + N * H * W * Cop * 2)

    return pl.pallas_call(
        _gemm_bias_relu_kernel,
        out_shape=jax.ShapeDtypeStruct((N, H, W, Cop), out_dtype),
        grid=grid,
        in_specs=[
            pl.BlockSpec((1, TH, W, _LANE), lambda n, c, h: (n, h, 0, 0)),
            pl.BlockSpec((_LANE, TCo), lambda n, c, h: (0, c)),
            pl.BlockSpec((1, TCo), lambda n, c, h: (0, c)),
        ],
        out_specs=pl.BlockSpec((1, TH, W, TCo), lambda n, c, h: (n, h, 0, c)),
        compiler_params=pltpu.CompilerParams(
            dimension_semantics=("parallel", "parallel", "parallel"),
            vmem_limit_bytes=64 * 1024 * 1024),
        cost_estimate=cost,
    )(patches, wmat, b2)


def _conv_general(x_nhwc, w_hwio, bias, Cop, TCo, compute_dtype, out_dtype):
    N, H, W, Cin = x_nhwc.shape
    Cout = w_hwio.shape[-1]
    Cip = _round_up(Cin, _LANE)

    # Pad the width so each padded row is a whole number of sublanes (relayout-free
    # in-kernel (rows, Wp2, C) <-> (rows*Wp2, C) reshapes); one extra bottom pad row
    # lets the kw-shifted views over-read into zeros instead of out of bounds.  The
    # extra columns are cropped at the kernel store.
    Wp2 = _round_up(W + 2, _SUBLANE)
    xp = jnp.pad(x_nhwc, ((0, 0), (1, 2), (1, Wp2 - W - 1), (0, Cip - Cin)))
    xp = xp.astype(compute_dtype)                                   # (N, H+3, Wp2, Cip)

    wk = jnp.pad(w_hwio, ((0, 0), (0, 0), (0, Cip - Cin), (0, Cop - Cout)))
    wk = wk.reshape(3, 3 * Cip, Cop).astype(compute_dtype)          # kh-major, (kw,ci) rows
    b2 = jnp.pad(bias, (0, Cop - Cout)).reshape(1, Cop).astype(jnp.float32)

    TH = _pick_tile_h(H, Wp2, TCo)
    grid = (N, Cop // TCo, H // TH)

    cost = pl.CostEstimate(
        flops=2 * N * H * Wp2 * 9 * Cip * Cop, transcendentals=0,
        bytes_accessed=xp.size * 2 + wk.size * 2 + N * H * W * Cop * 2)

    return pl.pallas_call(
        _conv3x3_slab_kernel,
        out_shape=jax.ShapeDtypeStruct((N, H, W, Cop), out_dtype),
        grid=grid,
        in_specs=[
            # Whole padded image, fetched once per image (index-invariant along c, h).
            # TODO(synk): for very large H*W on v7x (64 MiB VMEM), switch to an H-halo
            # BlockSpec (pl.Element row offsets) so the input block shrinks with TH.
            pl.BlockSpec((1, H + 3, Wp2, Cip), lambda n, c, h: (n, 0, 0, 0)),
            pl.BlockSpec((3, 3 * Cip, TCo), lambda n, c, h: (0, 0, c)),
            pl.BlockSpec((1, TCo), lambda n, c, h: (0, c)),
        ],
        out_specs=pl.BlockSpec((1, TH, W, TCo), lambda n, c, h: (n, h, 0, c)),
        compiler_params=pltpu.CompilerParams(
            dimension_semantics=("parallel", "parallel", "parallel"),
            vmem_limit_bytes=64 * 1024 * 1024),
        cost_estimate=cost,
    )(xp, wk, b2)


def repvgg_conv_nhwc(x_nhwc, w_hwio, bias, *,
                     compute_dtype=jnp.bfloat16, out_dtype=jnp.bfloat16):
    """Fused RepVGG block (3x3 conv, padding=1, stride=1) + bias + ReLU, NHWC in/out."""
    # TODO(synk): stride=2, groups>1 and non-ReLU act_layers activations of the original
    # module are not implemented in the kernels.
    N, H, W, Cin = x_nhwc.shape
    Cout = w_hwio.shape[-1]
    Cop = _round_up(Cout, _LANE)
    TCo = 256 if Cop % 256 == 0 else _LANE          # 256-wide N tiles where channels allow

    if 9 * Cin <= _LANE:
        out = _conv_small_cin(x_nhwc, w_hwio, bias, Cop, TCo, compute_dtype, out_dtype)
    else:
        out = _conv_general(x_nhwc, w_hwio, bias, Cop, TCo, compute_dtype, out_dtype)

    if Cop != Cout:
        # TODO(synk): keep channel-padded activations end-to-end so this crop (an extra
        # HBM pass) disappears in a full-network pipeline.
        out = out[..., :Cout]
    return out


@jax.jit
def repvgg_forward_nchw(x_nchw, w_hwio, bias):
    """NCHW wrapper matching the PyTorch module's layout."""
    # TODO(synk): production pipelines should stay NHWC end-to-end; these transposes are
    # extra HBM passes kept only for parity with the torch NCHW interface.
    x_nhwc = jnp.transpose(x_nchw, (0, 2, 3, 1))
    out = repvgg_conv_nhwc(x_nhwc, w_hwio, bias)
    return jnp.transpose(out, (0, 3, 1, 2))


# --------------------- parameter setup / BN fusion (glue) ------------------- #

def _fuse_bn(kernel_oihw, gamma, beta, mean, var, eps=1e-5):
    std = jnp.sqrt(var + eps)
    t = (gamma / std).reshape(-1, 1, 1, 1)
    return kernel_oihw * t, beta - mean * gamma / std


def make_repvgg_params(key, in_channels, out_channels):
    """Deterministic synthetic parameters; returns fused (w_hwio, bias, kernel_oihw).
    Matches RepVGGConvModule.get_equivalent_kernel_bias (eval-mode BN statistics)."""
    ks = jax.random.split(key, 5)

    w3 = jax.random.normal(ks[0], (out_channels, in_channels, 3, 3), jnp.float32) * 0.1
    w1 = jax.random.normal(ks[1], (out_channels, in_channels, 1, 1), jnp.float32) * 0.1

    def bn_params(k, c):
        k1, k2, k3, k4 = jax.random.split(k, 4)
        gamma = 1.0 + 0.1 * jax.random.normal(k1, (c,), jnp.float32)
        beta = 0.1 * jax.random.normal(k2, (c,), jnp.float32)
        mean = 0.1 * jax.random.normal(k3, (c,), jnp.float32)
        var = jnp.abs(jax.random.normal(k4, (c,), jnp.float32)) + 0.5
        return gamma, beta, mean, var

    k3_f, b3_f = _fuse_bn(w3, *bn_params(ks[2], out_channels))
    k1_f, b1_f = _fuse_bn(w1, *bn_params(ks[3], out_channels))
    k1_pad = jnp.pad(k1_f, ((0, 0), (0, 0), (1, 1), (1, 1)))

    if in_channels == out_channels:
        # identity branch = BatchNorm2d(in_channels), expressed as a centered 3x3 conv.
        id_kernel = jnp.zeros((in_channels, in_channels, 3, 3), jnp.float32)
        id_kernel = id_kernel.at[jnp.arange(in_channels),
                                 jnp.arange(in_channels), 1, 1].set(1.0)
        kid_f, bid_f = _fuse_bn(id_kernel, *bn_params(ks[4], in_channels))
    else:
        kid_f, bid_f = 0.0, 0.0

    kernel = k3_f + k1_pad + kid_f            # (Cout, Cin, 3, 3)  OIHW
    bias = b3_f + b1_f + bid_f                # (Cout,)
    w_hwio = jnp.transpose(kernel, (2, 3, 1, 0))
    return w_hwio, bias, kernel


# ---------------------------------- reference -------------------------------- #

def repvgg_ref(x_nchw, kernel_oihw, bias, compute_dtype=jnp.bfloat16):
    # Same operand rounding as the kernels (bf16 operands, f32 accumulation) so the
    # comparison isolates kernel correctness rather than the bf16 cast error.
    xq = x_nchw.astype(compute_dtype).astype(jnp.float32)
    wq = kernel_oihw.astype(compute_dtype).astype(jnp.float32)
    out = lax.conv_general_dilated(
        xq, wq, window_strides=(1, 1), padding=((1, 1), (1, 1)),
        dimension_numbers=("NCHW", "OIHW", "NCHW"),
        precision=lax.Precision.HIGHEST)
    out = out + bias.reshape(1, -1, 1, 1)
    return jnp.maximum(out, 0.0)


# ------------------------------------ main ----------------------------------- #

if __name__ == "__main__":
    key = jax.random.PRNGKey(0)
    kx1, kp1, kx2, kp2 = jax.random.split(key, 4)

    # Case 1: shipped small-channel shape -> small-Cin (im2col / K-folded) kernel.
    N, C, H, W = 2, 4, 16, 16
    x1 = jax.random.normal(kx1, (N, C, H, W), jnp.float32)
    w1, b1, kern1 = make_repvgg_params(kp1, C, C)
    out1 = jax.block_until_ready(repvgg_forward_nchw(x1, w1, b1))
    ref1 = repvgg_ref(x1, kern1, b1)
    assert out1.shape == (N, C, H, W)
    out1_f = out1.astype(jnp.float32)
    err1 = float(jnp.max(jnp.abs(out1_f - ref1)))
    assert jnp.allclose(out1_f, ref1, atol=5e-2, rtol=1e-2), err1

    # Case 2: lane-dense channels -> general slab kernel (also covers identity branch).
    N2, C2 = 1, 128
    x2 = jax.random.normal(kx2, (N2, C2, H, W), jnp.float32)
    w2, b2, kern2 = make_repvgg_params(kp2, C2, C2)
    out2 = jax.block_until_ready(repvgg_forward_nchw(x2, w2, b2))
    ref2 = repvgg_ref(x2, kern2, b2)
    assert out2.shape == (N2, C2, H, W)
    out2_f = out2.astype(jnp.float32)
    err2 = float(jnp.max(jnp.abs(out2_f - ref2)))
    assert jnp.allclose(out2_f, ref2, atol=5e-2, rtol=1e-2), err2

    print("KERNEL_OK")
</pallas_src>

<mosaic_0001>
module attributes {stable_mosaic.version = 11 : i64} {
  func.func @_gemm_bias_relu_kernel(%arg0: i32, %arg1: i32, %arg2: i32, %arg3: memref<1x16x16x128xbf16, #tpu.memory_space<vmem>>, %arg4: memref<128x128xbf16, #tpu.memory_space<vmem>>, %arg5: memref<1x128xf32, #tpu.memory_space<vmem>>, %arg6: memref<1x16x16x128xbf16, #tpu.memory_space<vmem>>) attributes {dimension_semantics = [#tpu.dimension_semantics<parallel>, #tpu.dimension_semantics<parallel>, #tpu.dimension_semantics<parallel>], iteration_bounds = array<i64: 2, 1, 1>, scalar_prefetch = 0 : i64, scratch_operands = 0 : i64, tpu.core_type = #tpu.core_type<tc>, window_params = [{transform_indices = @transform_0, window_bounds = array<i64: 1, 16, 16, 128>}, {transform_indices = @transform_1, window_bounds = array<i64: 128, 128>}, {transform_indices = @transform_2, window_bounds = array<i64: 1, 128>}, {transform_indices = @transform_3, window_bounds = array<i64: 1, 16, 16, 128>}]} {
    %c0 = arith.constant 0 : index
    %c0_0 = arith.constant 0 : index
    %c0_1 = arith.constant 0 : index
    %c0_2 = arith.constant 0 : index
    %0 = vector.load %arg3[%c0, %c0_0, %c0_1, %c0_2] : memref<1x16x16x128xbf16, #tpu.memory_space<vmem>>, vector<1x16x16x128xbf16>
    %1 = vector.shape_cast %0 : vector<1x16x16x128xbf16> to vector<16x16x128xbf16>
    %2 = vector.shape_cast %1 : vector<16x16x128xbf16> to vector<256x128xbf16>
    %c0_3 = arith.constant 0 : index
    %c0_4 = arith.constant 0 : index
    %3 = vector.load %arg4[%c0_3, %c0_4] : memref<128x128xbf16, #tpu.memory_space<vmem>>, vector<128x128xbf16>
    %cst = arith.constant dense<0.000000e+00> : vector<256x128xf32>
    %4 = tpu.matmul %2, %3, %cst {dimension_numbers = #tpu.dot_dimension_numbers<[1], [0], [0], [1], [0, 0, 1, 1], [], []>} : vector<256x128xbf16>, vector<128x128xbf16>, vector<256x128xf32> -> vector<256x128xf32>
    %c0_5 = arith.constant 0 : index
    %c0_6 = arith.constant 0 : index
    %5 = vector.load %arg5[%c0_5, %c0_6] : memref<1x128xf32, #tpu.memory_space<vmem>>, vector<1x128xf32>
    %6 = vector.broadcast %5 : vector<1x128xf32> to vector<256x128xf32>
    %7 = arith.addf %4, %6 : vector<256x128xf32>
    %cst_7 = arith.constant 0.000000e+00 : f32
    %8 = vector.broadcast %cst_7 : f32 to vector<256x128xf32>
    %9 = arith.maximumf %7, %8 : vector<256x128xf32>
    %10 = vector.shape_cast %9 : vector<256x128xf32> to vector<16x16x128xf32>
    %11 = arith.truncf %10 : vector<16x16x128xf32> to vector<16x16x128xbf16>
    %c0_8 = arith.constant 0 : index
    %c0_9 = arith.constant 0 : index
    %c0_10 = arith.constant 0 : index
    %c0_11 = arith.constant 0 : index
    %12 = vector.load %arg6[%c0_8, %c0_9, %c0_10, %c0_11] : memref<1x16x16x128xbf16, #tpu.memory_space<vmem>>, vector<1x16x16x128xbf16>
    %13 = vector.shape_cast %12 : vector<1x16x16x128xbf16> to vector<16x16x128xbf16>
    %14 = vector.shape_cast %11 : vector<16x16x128xbf16> to vector<1x16x16x128xbf16>
    tpu.vector_store %arg6[%c0_8, %c0_9, %c0_10, %c0_11], %14 {strides = array<i32>} : memref<1x16x16x128xbf16, #tpu.memory_space<vmem>>, vector<1x16x16x128xbf16>,
    return
  }
  func.func @transform_0(%arg0: i32, %arg1: i32, %arg2: i32) -> (i32, i32, i32, i32) {
    %c0_i32 = arith.constant 0 : i32
    %c0_i32_0 = arith.constant 0 : i32
    %c0_i32_1 = arith.constant 0 : i32
    return %arg0, %arg2, %c0_i32, %c0_i32_0 : i32, i32, i32, i32
  }
  func.func @transform_1(%arg0: i32, %arg1: i32, %arg2: i32) -> (i32, i32) {
    %c0_i32 = arith.constant 0 : i32
    %c0_i32_0 = arith.constant 0 : i32
    return %c0_i32, %arg1 : i32, i32
  }
  func.func @transform_2(%arg0: i32, %arg1: i32, %arg2: i32) -> (i32, i32) {
    %c0_i32 = arith.constant 0 : i32
    %c0_i32_0 = arith.constant 0 : i32
    return %c0_i32, %arg1 : i32, i32
  }
  func.func @transform_3(%arg0: i32, %arg1: i32, %arg2: i32) -> (i32, i32, i32, i32) {
    %c0_i32 = arith.constant 0 : i32
    %c0_i32_0 = arith.constant 0 : i32
    return %arg0, %arg2, %c0_i32, %arg1 : i32, i32, i32, i32
  }
}

</mosaic_0001>

<llo_original>
// kernel: repvgg_forward_nchw.1
$region0: #{repvgg_forward_nchw.1}
  #allocation0 [shape = 'u32[]', space=smem, size = 0x4, offset = 0x4, fixed_abs, tag = 'smem constant byte address 0x4 - core index']
  #allocation1 [shape = 'u32[144,128]{1,0:T(1,128)}', space=vmem, size = 0x12000, scoped, tag = 'internal scratch']
  %s0 = inlined_call_operand.hbm [shape: bf16[2,16,16,128], index: 0, kind: input, shape index: {}]
  %s1 = inlined_call_operand.hbm [shape: bf16[128,128], index: 1, kind: input, shape index: {}]
  %s2 = inlined_call_operand.hbm [shape: f32[1,128], index: 2, kind: input, shape index: {}]
  %s3 = inlined_call_operand.hbm [shape: bf16[2,16,16,128], index: 3, kind: output, shape index: {}]
  %s4 = sld [smem:[#allocation0]]
  $region57: #{repvgg_forward_nchw.1} parent=0
    _
  %s6 = ssub.s32 1, %s4
  %s7 = scalar_select 0, %s6, %s4
  $region1: #{repvgg_forward_nchw.1} parent=0
    #allocation2 [shape = 'u8[131072]{0}', space=vmem, size = 0x20000, scoped, tag = 'input window, operand 0']
    #allocation3 [shape = 's32[2]{0}', space=sflag, size = 0x8, scoped, tag = 'scoped memory for repvgg_forward_nchw.1']
    #allocation4 [shape = 's32[2]{0}', space=sflag, size = 0x8, scoped, tag = 'scoped memory for repvgg_forward_nchw.1']
    #allocation5 [shape = 'u8[32768]{0}', space=vmem, size = 0x8000, scoped, tag = 'input window, operand 1, single buffered']
    #allocation6 [shape = 's32[1]{0}', space=sflag, size = 0x4, scoped, tag = 'scoped memory for repvgg_forward_nchw.1']
    #allocation7 [shape = 'u8[512]{0}', space=vmem, size = 0x400, scoped, tag = 'input window, operand 2, single buffered']
    #allocation8 [shape = 'u8[131072]{0}', space=vmem, size = 0x20000, scoped, tag = 'output window, operand 0']
    %8 = vsyncpa [#allocation3], 0
    %s9 = scalar_lea.sflag [#allocation3], 1
    %10 = vsyncpa %s9, 0
    %11 = vsyncpa [#allocation6], 0
    %12 = vsyncpa [#allocation4], 0
    %s13 = scalar_lea.sflag [#allocation4], 1
    %14 = vsyncpa %s13, 0
    loop: start=0, step=1, limit=4
    $region2: #{repvgg_forward_nchw.1} parent=1 // loop_pre_header
      _
    $region3: #{repvgg_forward_nchw.1} parent=1 // loop_header
      %s16 = sphi 0, %s20
      %p17 = scmp.ge.s32.totalorder %s16, 4
      %s23 = sphi 0, %s42
      %s24 = sphi 0, %s38
      %s25 = sphi 0, %s34
      %s26 = sphi 0, %s23
      %s27 = sphi 0, %s24
      %s28 = sphi 0, %s25
      %s29 = sphi 0, %s26
      %s30 = sphi 0, %s27
      %s31 = sphi 0, %s28
      %s47 = sphi 0, %s49
      %s50 = sphi 0, %s47
      %s51 = sphi 0, %s50
      %s67 = sphi 0, %s51
      %s73 = sphi 0, %s75
      %s76 = sphi 0, %s73
      %s77 = sphi 0, %s76
      %s93 = sphi 0, %s77
      %s99 = sphi 0, %s101
      %s102 = sphi 0, %s99
      %s103 = sphi 0, %s102
      %s119 = sphi 0, %s103
      %s129 = sphi 0, %s131
      %s132 = sphi 0, %s129
      %s133 = sphi 0, %s132
      %s149 = sphi 0, %s133
    $region4: #{repvgg_forward_nchw.1} parent=1 // loop_header_branch
      %19 = sbr.rel (%p17) target = $region8
    $region5: #{repvgg_forward_nchw.1} parent=1 // loop_body
      %s21 = ssub.s32 %s16, 1
      %s22 = ssub.s32 %s16, 2
      %s32 = sadd.s32 1, %s25
      %p33 = scmp.ge.s32.totalorder %s32, 1
      %s34 = scalar_select %p33, 0, %s32
      %s35 = sadd.s32 1, %s24
      %s36 = scalar_select %p33, %s35, %s24
      %p37 = scmp.ge.s32.totalorder %s36, 1
      %s38 = scalar_select %p37, 0, %s36
      %s39 = sadd.s32 1, %s23
      %s40 = scalar_select %p37, %s39, %s23
      %p41 = scmp.ge.s32.totalorder %s40, 2
      %s42 = scalar_select %p41, 0, %s40
      %s43 = ssub.s32 %s23, %s42
      %s44 = ssub.s32 %s25, %s34
      %s45 = sor.u32 %s43, %s44
      %p46 = scmp.eq.s32.totalorder %s45, 0
      %s48 = sadd.s32 %s47, 1
      %s49 = scalar_select %p46, %s47, %s48
      %p52 = pneg %p46
      %p53 = scmp.eq.s32.totalorder %s16, 1
      %p54 = por %p52, %p53
      %p55 = scmp.ne.s32.totalorder %s47, %s50
      %p56 = scmp.eq.s32.totalorder %s16, 0
      %p57 = por %p55, %p56
      %p58 = scmp.ne.s32.totalorder %s47, %s50
      %p59 = scmp.eq.s32.totalorder %s21, 1
      %p60 = por %p58, %p59
      %p61 = scmp.ne.s32.totalorder %s50, %s51
      %p62 = scmp.eq.s32.totalorder %s21, 0
      %p63 = por %p61, %p62
      %p64 = scmp.ne.s32.totalorder %s50, %s51
      %p65 = scmp.eq.s32.totalorder %s22, 1
      %p66 = por %p64, %p65
      %p68 = scmp.ne.s32.totalorder %s51, %s67
      %p69 = scmp.eq.s32.totalorder %s22, 0
      %p70 = por %p68, %p69
      %s71 = ssub.s32 %s24, %s38
      %p72 = scmp.eq.s32.totalorder %s71, 0
      %s74 = sadd.s32 %s73, 1
      %s75 = scalar_select %p72, %s73, %s74
      %p78 = pneg %p72
      %p79 = scmp.eq.s32.totalorder %s16, 1
      %p80 = por %p78, %p79
      %p81 = scmp.ne.s32.totalorder %s73, %s76
      %p82 = scmp.eq.s32.totalorder %s16, 0
      %p83 = por %p81, %p82
      %p84 = scmp.ne.s32.totalorder %s73, %s76
      %p85 = scmp.eq.s32.totalorder %s21, 1
      %p86 = por %p84, %p85
      %p87 = scmp.ne.s32.totalorder %s76, %s77
      %p88 = scmp.eq.s32.totalorder %s21, 0
      %p89 = por %p87, %p88
      %p90 = scmp.ne.s32.totalorder %s76, %s77
      %p91 = scmp.eq.s32.totalorder %s22, 1
      %p92 = por %p90, %p91
      %p94 = scmp.ne.s32.totalorder %s77, %s93
      %p95 = scmp.eq.s32.totalorder %s22, 0
      %p96 = por %p94, %p95
      %s97 = ssub.s32 %s24, %s38
      %p98 = scmp.eq.s32.totalorder %s97, 0
      %s100 = sadd.s32 %s99, 1
      %s101 = scalar_select %p98, %s99, %s100
      %p104 = pneg %p98
      %p105 = scmp.eq.s32.totalorder %s16, 1
      %p106 = por %p104, %p105
      %p107 = scmp.ne.s32.totalorder %s99, %s102
      %p108 = scmp.eq.s32.totalorder %s16, 0
      %p109 = por %p107, %p108
      %p110 = scmp.ne.s32.totalorder %s99, %s102
      %p111 = scmp.eq.s32.totalorder %s21, 1
      %p112 = por %p110, %p111
      %p113 = scmp.ne.s32.totalorder %s102, %s103
      %p114 = scmp.eq.s32.totalorder %s21, 0
      %p115 = por %p113, %p114
      %p116 = scmp.ne.s32.totalorder %s102, %s103
      %p117 = scmp.eq.s32.totalorder %s22, 1
      %p118 = por %p116, %p117
      %p120 = scmp.ne.s32.totalorder %s103, %s119
      %p121 = scmp.eq.s32.totalorder %s22, 0
      %p122 = por %p120, %p121
      %s123 = ssub.s32 %s23, %s42
      %s124 = ssub.s32 %s25, %s34
      %s125 = sor.u32 %s123, %s124
      %s126 = ssub.s32 %s24, %s38
      %s127 = sor.u32 %s125, %s126
      %p128 = scmp.eq.s32.totalorder %s127, 0
      %s130 = sadd.s32 %s129, 1
      %s131 = scalar_select %p128, %s129, %s130
      %p134 = pneg %p128
      %p135 = scmp.eq.s32.totalorder %s16, 1
      %p136 = por %p134, %p135
      %p137 = scmp.ne.s32.totalorder %s129, %s132
      %p138 = scmp.eq.s32.totalorder %s16, 0
      %p139 = por %p137, %p138
      %p140 = scmp.ne.s32.totalorder %s129, %s132
      %p141 = scmp.eq.s32.totalorder %s21, 1
      %p142 = por %p140, %p141
      %p143 = scmp.ne.s32.totalorder %s132, %s133
      %p144 = scmp.eq.s32.totalorder %s21, 0
      %p145 = por %p143, %p144
      %p146 = scmp.ne.s32.totalorder %s132, %s133
      %p147 = scmp.eq.s32.totalorder %s22, 1
      %p148 = por %p146, %p147
      %p150 = scmp.ne.s32.totalorder %s133, %s149
      %p151 = scmp.eq.s32.totalorder %s22, 0
      %p152 = por %p150, %p151
      %p153 = scmp.le.s32.totalorder 1, %s16
      %p154 = scmp.lt.s32.totalorder %s16, 3
      %p155 = pnand %p153, %p154
      %p156 = pneg %p155
      // Predicated region
      $region9: #{repvgg_forward_nchw.1} parent=5 // pred_check
        _
      $region10: #{repvgg_forward_nchw.1} parent=5 // pred_check_branch
        %158 = sbr.rel (%p155) target = $region12
      $region11: #{repvgg_forward_nchw.1} parent=5 // pred_region
        %s159 = ssub.s32 %s16, 1
        // Predicated region
        $region13: #{repvgg_forward_nchw.1} parent=11 // pred_check
          %p160 = pneg %p89
        $region14: #{repvgg_forward_nchw.1} parent=11 // pred_check_branch
          %162 = sbr.rel (%p160) target = $region16
        $region15: #{repvgg_forward_nchw.1} parent=11 // pred_region
          %s164 = ssub.s32 1024, 1024
          %165 = vsyncadd [#allocation6], %s164
          %s166 = smul.addr %s27, 64
          %s167 = scalar_lea.hbm %s1, %s166
          %s168 = sshll.u32 [#allocation5], 4
          %s169 = int_to_ptr.vmem [resolvable:$true] %s168
          %174 = dma.hbm_to_vmem [thread:$0]  %s167, 1024, %s169, [#allocation6], 64, 64, 4
        $region16: #{repvgg_forward_nchw.1} parent=11 // pred_fallthru
          _
        // Predicated region
        $region17: #{repvgg_forward_nchw.1} parent=11 // pred_check
          %p175 = pneg %p115
        $region18: #{repvgg_forward_nchw.1} parent=11 // pred_check_branch
          %177 = sbr.rel (%p175) target = $region20
        $region19: #{repvgg_forward_nchw.1} parent=11 // pred_region
          %s179 = ssub.s32 16, 16
          %180 = vsyncadd [#allocation6], %s179
          %s181 = smul.addr %s27, 16
          %s182 = scalar_lea.hbm %s2, %s181
          %s184 = sshll.u32 [#allocation7], 4
          %s185 = int_to_ptr.vmem [resolvable:$true] %s184
          %187 = dma.hbm_to_vmem [thread:$0]  %s182, 16, %s185, [#allocation6]
        $region20: #{repvgg_forward_nchw.1} parent=11 // pred_fallthru
          _
      $region12: #{repvgg_forward_nchw.1} parent=5 // pred_fallthru
        _
      %p188 = scmp.lt.s32.totalorder %s16, 2
      // Predicated region
      $region21: #{repvgg_forward_nchw.1} parent=5 // pred_check
        %p189 = pneg %p188
      $region22: #{repvgg_forward_nchw.1} parent=5 // pred_check_branch
        %191 = sbr.rel (%p189) target = $region24
      $region23: #{repvgg_forward_nchw.1} parent=5 // pred_region
        // Predicated region
        $region25: #{repvgg_forward_nchw.1} parent=23 // pred_check
          %p192 = pneg %p57
        $region26: #{repvgg_forward_nchw.1} parent=23 // pred_check_branch
          %194 = sbr.rel (%p192) target = $region28
        $region27: #{repvgg_forward_nchw.1} parent=23 // pred_region
          %s195 = sand.u32 %s47, 1
          %s196 = scalar_lea.sflag [#allocation3], %s195
          %s197 = sand.u32 %s47, 1
          %s198 = smul.addr %s197, 128
          %s199 = scalar_lea.vmem [#allocation2], %s198
          %s200 = smul.u32 16, %s25
          %s202 = ssub.s32 2048, 2048
          %203 = vsyncadd %s196, %s202
          %s204 = smul.addr %s200, 2
          %s205 = smul.addr %s23, 32
          %s206 = sadd.s32 %s204, %s205
          %s207 = smul.addr %s206, 64
          %s208 = scalar_lea.hbm %s0, %s207
          %s209 = sshll.u32 %s199, 4
          %s210 = int_to_ptr.vmem [resolvable:$true] %s209
          %215 = dma.hbm_to_vmem [thread:$0]  %s208, 2048, %s210, %s196, 64, 64, 4
        $region28: #{repvgg_forward_nchw.1} parent=23 // pred_fallthru
          _
      $region24: #{repvgg_forward_nchw.1} parent=5 // pred_fallthru
        _
      %p216 = scmp.le.s32.totalorder 1, %s16
      %p217 = scmp.lt.s32.totalorder %s16, 3
      %p218 = pnand %p216, %p217
      %p219 = pneg %p218
      // Predicated region
      $region29: #{repvgg_forward_nchw.1} parent=5 // pred_check
        _
      $region30: #{repvgg_forward_nchw.1} parent=5 // pred_check_branch
        %221 = sbr.rel (%p218) target = $region32
      $region31: #{repvgg_forward_nchw.1} parent=5 // pred_region
        %s222 = ssub.s32 %s16, 1
        %s223 = sand.u32 %s50, 1
        %s224 = scalar_lea.sflag [#allocation3], %s223
        %s225 = sand.u32 %s50, 1
        %s226 = smul.addr %s225, 128
        %s227 = scalar_lea.vmem [#allocation2], %s226
        // Predicated region
        $region33: #{repvgg_forward_nchw.1} parent=31 // pred_check
          %p228 = pneg %p63
        $region34: #{repvgg_forward_nchw.1} parent=31 // pred_check_branch
          %230 = sbr.rel (%p228) target = $region36
        $region35: #{repvgg_forward_nchw.1} parent=31 // pred_region
          %231 = dma.done %s224, 2048
        $region36: #{repvgg_forward_nchw.1} parent=31 // pred_fallthru
          _
        // Predicated region
        $region37: #{repvgg_forward_nchw.1} parent=31 // pred_check
          %p232 = pneg %p89
        $region38: #{repvgg_forward_nchw.1} parent=31 // pred_check_branch
          %234 = sbr.rel (%p232) target = $region40
        $region39: #{repvgg_forward_nchw.1} parent=31 // pred_region
          %235 = dma.done [#allocation6], 1024
        $region40: #{repvgg_forward_nchw.1} parent=31 // pred_fallthru
          _
        // Predicated region
        $region41: #{repvgg_forward_nchw.1} parent=31 // pred_check
          %p236 = pneg %p115
        $region42: #{repvgg_forward_nchw.1} parent=31 // pred_check_branch
          %238 = sbr.rel (%p236) target = $region44
        $region43: #{repvgg_forward_nchw.1} parent=31 // pred_region
          %239 = dma.done [#allocation6], 16
        $region44: #{repvgg_forward_nchw.1} parent=31 // pred_fallthru
          _
        %s240 = sand.u32 %s50, 1
        %s241 = scalar_lea.sflag [#allocation3], %s240
        %s242 = sand.u32 %s50, 1
        %s243 = smul.addr %s242, 128
        %s244 = scalar_lea.vmem [#allocation2], %s243
        %p245 = pneg %p63
        %p246 = pneg %p60
        %p247 = pneg %p89
        %p248 = pneg %p86
        %p249 = pneg %p115
        %p250 = pneg %p112
        %p251 = pneg %p145
        %p252 = pneg %p142
        %s253 = sand.u32 %s132, 1
        %s254 = scalar_lea.sflag [#allocation4], %s253
        %s255 = sand.u32 %s132, 1
        %s256 = smul.addr %s255, 128
        %s257 = scalar_lea.vmem [#allocation8], %s256
        %s258 = smul.u32 16, %s28
        %s259 = smul.u32 16, %s28
        %v261 = vld [vmem:[%s227] sm:$0xf]
        %v262 = vld [vmem:[%s227 + $0x4] sm:$0xf]
        %v263 = vld [vmem:[%s227 + $0x8] sm:$0xf]
        %v264 = vld [vmem:[%s227 + $0xc] sm:$0xf]
        %v265 = vld [vmem:[%s227 + $0x10] sm:$0xf]
        %v266 = vld [vmem:[%s227 + $0x14] sm:$0xf]
        %v267 = vld [vmem:[%s227 + $0x18] sm:$0xf]
        %v268 = vld [vmem:[%s227 + $0x1c] sm:$0xf]
        %v269 = vld [vmem:[%s227 + $0x20] sm:$0xf]
        %v270 = vld [vmem:[%s227 + $0x24] sm:$0xf]
        %v271 = vld [vmem:[%s227 + $0x28] sm:$0xf]
        %v272 = vld [vmem:[%s227 + $0x2c] sm:$0xf]
        %v273 = vld [vmem:[%s227 + $0x30] sm:$0xf]
        %v274 = vld [vmem:[%s227 + $0x34] sm:$0xf]
        %v275 = vld [vmem:[%s227 + $0x38] sm:$0xf]
        %v276 = vld [vmem:[%s227 + $0x3c] sm:$0xf]
        %v277 = vld [vmem:[%s227 + $0x40] sm:$0xf]
        %v278 = vld [vmem:[%s227 + $0x44] sm:$0xf]
        %v279 = vld [vmem:[%s227 + $0x48] sm:$0xf]
        %v280 = vld [vmem:[%s227 + $0x4c] sm:$0xf]
        %v281 = vld [vmem:[%s227 + $0x50] sm:$0xf]
        %v282 = vld [vmem:[%s227 + $0x54] sm:$0xf]
        %v283 = vld [vmem:[%s227 + $0x58] sm:$0xf]
        %v284 = vld [vmem:[%s227 + $0x5c] sm:$0xf]
        %v285 = vld [vmem:[%s227 + $0x60] sm:$0xf]
        %v286 = vld [vmem:[%s227 + $0x64] sm:$0xf]
        %v287 = vld [vmem:[%s227 + $0x68] sm:$0xf]
        %v288 = vld [vmem:[%s227 + $0x6c] sm:$0xf]
        %v289 = vld [vmem:[%s227 + $0x70] sm:$0xf]
        %v290 = vld [vmem:[%s227 + $0x74] sm:$0xf]
        %v291 = vld [vmem:[%s227 + $0x78] sm:$0xf]
        %v292 = vld [vmem:[%s227 + $0x7c] sm:$0xf]
        %v293 = vld [vmem:[#allocation5] sm:$0xf]
        %v294 = vld [vmem:[#allocation5 + $0x4] sm:$0xf]
        %v295 = vld [vmem:[#allocation5 + $0x8] sm:$0xf]
        %v296 = vld [vmem:[#allocation5 + $0xc] sm:$0xf]
        %v297 = vld [vmem:[#allocation5 + $0x10] sm:$0xf]
        %v298 = vld [vmem:[#allocation5 + $0x14] sm:$0xf]
        %v299 = vld [vmem:[#allocation5 + $0x18] sm:$0xf]
        %v300 = vld [vmem:[#allocation5 + $0x1c] sm:$0xf]
        %v301 = vld [vmem:[#allocation5 + $0x20] sm:$0xf]
        %v302 = vld [vmem:[#allocation5 + $0x24] sm:$0xf]
        %v303 = vld [vmem:[#allocation5 + $0x28] sm:$0xf]
        %v304 = vld [vmem:[#allocation5 + $0x2c] sm:$0xf]
        %v305 = vld [vmem:[#allocation5 + $0x30] sm:$0xf]
        %v306 = vld [vmem:[#allocation5 + $0x34] sm:$0xf]
        %v307 = vld [vmem:[#allocation5 + $0x38] sm:$0xf]
        %v308 = vld [vmem:[#allocation5 + $0x3c] sm:$0xf]
        %v309 = vld [vmem:[#allocation7] sm:$0x1]
        %v311 = vlaneseq
        %v312 = vshrl.u32 %v311, 7
        %v313 = vsub.s32 0, %v312
        %v314 = vrot.slane %v309, %v313
        %v348 = vunpack.c.l.b16 %v261
        %v349 = vunpack.c.l.b16 %v262
        %v350 = vunpack.c.l.b16 %v263
        %v351 = vunpack.c.l.b16 %v264
        %v352 = vunpack.c.l.b16 %v265
        %v353 = vunpack.c.l.b16 %v266
        %v354 = vunpack.c.l.b16 %v267
        %v355 = vunpack.c.l.b16 %v268
        %v356 = vunpack.c.l.b16 %v269
        %v357 = vunpack.c.l.b16 %v270
        %v358 = vunpack.c.l.b16 %v271
        %v359 = vunpack.c.l.b16 %v272
        %v360 = vunpack.c.l.b16 %v273
        %v361 = vunpack.c.l.b16 %v274
        %v362 = vunpack.c.l.b16 %v275
        %v363 = vunpack.c.l.b16 %v276
        %v364 = vunpack.c.l.b16 %v277
        %v365 = vunpack.c.l.b16 %v278
        %v366 = vunpack.c.l.b16 %v279
        %v367 = vunpack.c.l.b16 %v280
        %v368 = vunpack.c.l.b16 %v281
        %v369 = vunpack.c.l.b16 %v282
        %v370 = vunpack.c.l.b16 %v283
        %v371 = vunpack.c.l.b16 %v284
        %v372 = vunpack.c.l.b16 %v285
        %v373 = vunpack.c.l.b16 %v286
        %v374 = vunpack.c.l.b16 %v287
        %v375 = vunpack.c.l.b16 %v288
        %v376 = vunpack.c.l.b16 %v289
        %v377 = vunpack.c.l.b16 %v290
        %v378 = vunpack.c.l.b16 %v291
        %v379 = vunpack.c.l.b16 %v292
        %v380 = vpack.c.b16 %v349, %v348
        %v381 = vpack.c.b16 %v351, %v350
        %v382 = vpack.c.b16 %v353, %v352
        %v383 = vpack.c.b16 %v355, %v354
        %v384 = vpack.c.b16 %v357, %v356
        %v385 = vpack.c.b16 %v359, %v358
        %v386 = vpack.c.b16 %v361, %v360
        %v387 = vpack.c.b16 %v363, %v362
        %v388 = vpack.c.b16 %v365, %v364
        %v389 = vpack.c.b16 %v367, %v366
        %v390 = vpack.c.b16 %v369, %v368
        %v391 = vpack.c.b16 %v371, %v370
        %v392 = vpack.c.b16 %v373, %v372
        %v393 = vpack.c.b16 %v375, %v374
        %v394 = vpack.c.b16 %v377, %v376
        %v395 = vpack.c.b16 %v379, %v378
        %v428 = vunpack.c.l.b16 %v293
        %v429 = vunpack.c.l.b16 %v294
        %v430 = vunpack.c.l.b16 %v295
        %v431 = vunpack.c.l.b16 %v296
        %v432 = vunpack.c.l.b16 %v297
        %v433 = vunpack.c.l.b16 %v298
        %v434 = vunpack.c.l.b16 %v299
        %v435 = vunpack.c.l.b16 %v300
        %v436 = vunpack.c.l.b16 %v301
        %v437 = vunpack.c.l.b16 %v302
        %v438 = vunpack.c.l.b16 %v303
        %v439 = vunpack.c.l.b16 %v304
        %v440 = vunpack.c.l.b16 %v305
        %v441 = vunpack.c.l.b16 %v306
        %v442 = vunpack.c.l.b16 %v307
        %v443 = vunpack.c.l.b16 %v308
        %v444 = vpack.c.b16 %v429, %v428
        %v445 = vpack.c.b16 %v431, %v430
        %v446 = vpack.c.b16 %v433, %v432
        %v447 = vpack.c.b16 %v435, %v434
        %v448 = vpack.c.b16 %v437, %v436
        %v449 = vpack.c.b16 %v439, %v438
        %v450 = vpack.c.b16 %v441, %v440
        %v451 = vpack.c.b16 %v443, %v442
        %460 = vmatprep.subr.bf16.mxu0 0
        %461 = vmatpush1.bf16.msra.mxu0 %v444
        %462 = vmatprep.subr.bf16.mxu0 0
        %463 = vmatpush1.bf16.msra.mxu0 %v445
        %464 = vmatprep.subr.bf16.mxu0 0
        %465 = vmatpush1.bf16.msra.mxu0 %v446
        %466 = vmatprep.subr.bf16.mxu0 0
        %467 = vmatpush1.bf16.msra.mxu0 %v447
        %468 = vmatprep.subr.bf16.mxu0 0
        %469 = vmatpush1.bf16.msra.mxu0 %v448
        %470 = vmatprep.subr.bf16.mxu0 0
        %471 = vmatpush1.bf16.msra.mxu0 %v449
        %472 = vmatprep.subr.bf16.mxu0 0
        %473 = vmatpush1.bf16.msra.mxu0 %v450
        %474 = vmatprep.subr.bf16.mxu0 0
        %475 = vmatpush1.bf16.msra.mxu0 %v451
        %476 = vmatprep.subr.bf16.mxu0 0
        %477 = vmatpush1.bf16.msra.mxu0 0
        %478 = vmatprep.subr.bf16.mxu0 0
        %479 = vmatpush1.bf16.msra.mxu0 0
        %480 = vmatprep.subr.bf16.mxu0 0
        %481 = vmatpush1.bf16.msra.mxu0 0
        %482 = vmatprep.subr.bf16.mxu0 0
        %483 = vmatpush1.bf16.msra.mxu0 0
        %484 = vmatprep.subr.bf16.mxu0 0
        %485 = vmatpush1.bf16.msra.mxu0 0
        %486 = vmatprep.subr.bf16.mxu0 0
        %487 = vmatpush1.bf16.msra.mxu0 0
        %488 = vmatprep.subr.bf16.mxu0 0
        %489 = vmatpush1.bf16.msra.mxu0 0
        %490 = vmatprep.subr.bf16.mxu0 0
        %491 = vmatpush1.bf16.msra.mxu0 0
        %492 = vmatprep.mubr.bf16.mxu0 0
        %493 = vmatmul.mubr.bf16.gmra.mrb[0].mxu0 %v380
        %v494 = vpop.f32.mrb[0].mxu0
        %v495 = vadd.f32 %v314, %v494
        %v496 = vpop.f32.mrb[0].mxu0
        %v497 = vpop.f32.mrb[0].mxu0
        %v498 = vadd.f32 %v314, %v497
        %v499 = vpop.f32.mrb[0].mxu0
        %500 = vmatprep.mubr.bf16.mxu0 0
        %501 = vmatmul.mubr.bf16.gmra.mrb[0].mxu0 %v381
        %v502 = vpop.f32.mrb[0].mxu0
        %v503 = vadd.f32 %v314, %v502
        %v504 = vpop.f32.mrb[0].mxu0
        %v505 = vpop.f32.mrb[0].mxu0
        %v506 = vadd.f32 %v314, %v505
        %v507 = vpop.f32.mrb[0].mxu0
        %508 = vmatprep.mubr.bf16.mxu0 0
        %509 = vmatmul.mubr.bf16.gmra.mrb[0].mxu0 %v382
        %v510 = vpop.f32.mrb[0].mxu0
        %v511 = vadd.f32 %v314, %v510
        %v512 = vpop.f32.mrb[0].mxu0
        %v513 = vpop.f32.mrb[0].mxu0
        %v514 = vadd.f32 %v314, %v513
        %v515 = vpop.f32.mrb[0].mxu0
        %516 = vmatprep.mubr.bf16.mxu0 0
        %517 = vmatmul.mubr.bf16.gmra.mrb[0].mxu0 %v383
        %v518 = vpop.f32.mrb[0].mxu0
        %v519 = vadd.f32 %v314, %v518
        %v520 = vpop.f32.mrb[0].mxu0
        %v521 = vpop.f32.mrb[0].mxu0
        %v522 = vadd.f32 %v314, %v521
        %v523 = vpop.f32.mrb[0].mxu0
        %524 = vmatprep.mubr.bf16.mxu0 0
        %525 = vmatmul.mubr.bf16.gmra.mrb[0].mxu0 %v384
        %v526 = vpop.f32.mrb[0].mxu0
        %v527 = vadd.f32 %v314, %v526
        %v528 = vpop.f32.mrb[0].mxu0
        %v529 = vpop.f32.mrb[0].mxu0
        %v530 = vadd.f32 %v314, %v529
        %v531 = vpop.f32.mrb[0].mxu0
        %532 = vmatprep.mubr.bf16.mxu0 0
        %533 = vmatmul.mubr.bf16.gmra.mrb[0].mxu0 %v385
        %v534 = vpop.f32.mrb[0].mxu0
        %v535 = vadd.f32 %v314, %v534
        %v536 = vpop.f32.mrb[0].mxu0
        %v537 = vpop.f32.mrb[0].mxu0
        %v538 = vadd.f32 %v314, %v537
        %v539 = vpop.f32.mrb[0].mxu0
        %540 = vmatprep.mubr.bf16.mxu0 0
        %541 = vmatmul.mubr.bf16.gmra.mrb[0].mxu0 %v386
        %v542 = vpop.f32.mrb[0].mxu0
        %v543 = vadd.f32 %v314, %v542
        %v544 = vpop.f32.mrb[0].mxu0
        %v545 = vpop.f32.mrb[0].mxu0
        %v546 = vadd.f32 %v314, %v545
        %v547 = vpop.f32.mrb[0].mxu0
        %548 = vmatprep.mubr.bf16.mxu0 0
        %549 = vmatmul.mubr.bf16.gmra.mrb[0].mxu0 %v387
        %v550 = vpop.f32.mrb[0].mxu0
        %v551 = vadd.f32 %v314, %v550
        %v552 = vpop.f32.mrb[0].mxu0
        %v553 = vpop.f32.mrb[0].mxu0
        %v554 = vadd.f32 %v314, %v553
        %v555 = vpop.f32.mrb[0].mxu0
        %556 = vmatprep.mubr.bf16.mxu0 0
        %557 = vmatmul.mubr.bf16.gmra.mrb[0].mxu0 %v388
        %v558 = vpop.f32.mrb[0].mxu0
        %v559 = vadd.f32 %v314, %v558
        %v560 = vpop.f32.mrb[0].mxu0
        %v561 = vpop.f32.mrb[0].mxu0
        %v562 = vadd.f32 %v314, %v561
        %v563 = vpop.f32.mrb[0].mxu0
        %564 = vmatprep.mubr.bf16.mxu0 0
        %565 = vmatmul.mubr.bf16.gmra.mrb[0].mxu0 %v389
        %v566 = vpop.f32.mrb[0].mxu0
        %v567 = vadd.f32 %v314, %v566
        %v568 = vpop.f32.mrb[0].mxu0
        %v569 = vpop.f32.mrb[0].mxu0
        %v570 = vadd.f32 %v314, %v569
        %v571 = vpop.f32.mrb[0].mxu0
        %572 = vmatprep.mubr.bf16.mxu0 0
        %573 = vmatmul.mubr.bf16.gmra.mrb[0].mxu0 %v390
        %v574 = vpop.f32.mrb[0].mxu0
        %v575 = vadd.f32 %v314, %v574
        %v576 = vpop.f32.mrb[0].mxu0
        %v577 = vpop.f32.mrb[0].mxu0
        %v578 = vadd.f32 %v314, %v577
        %v579 = vpop.f32.mrb[0].mxu0
        %580 = vmatprep.mubr.bf16.mxu0 0
        %581 = vmatmul.mubr.bf16.gmra.mrb[0].mxu0 %v391
        %v582 = vpop.f32.mrb[0].mxu0
        %v583 = vadd.f32 %v314, %v582
        %v584 = vpop.f32.mrb[0].mxu0
        %v585 = vpop.f32.mrb[0].mxu0
        %v586 = vadd.f32 %v314, %v585
        %v587 = vpop.f32.mrb[0].mxu0
        %588 = vmatprep.mubr.bf16.mxu0 0
        %589 = vmatmul.mubr.bf16.gmra.mrb[0].mxu0 %v392
        %v590 = vpop.f32.mrb[0].mxu0
        %v591 = vadd.f32 %v314, %v590
        %v592 = vpop.f32.mrb[0].mxu0
        %v593 = vpop.f32.mrb[0].mxu0
        %v594 = vadd.f32 %v314, %v593
        %v595 = vpop.f32.mrb[0].mxu0
        %596 = vmatprep.mubr.bf16.mxu0 0
        %597 = vmatmul.mubr.bf16.gmra.mrb[0].mxu0 %v393
        %v598 = vpop.f32.mrb[0].mxu0
        %v599 = vadd.f32 %v314, %v598
        %v600 = vpop.f32.mrb[0].mxu0
        %v601 = vpop.f32.mrb[0].mxu0
        %v602 = vadd.f32 %v314, %v601
        %v603 = vpop.f32.mrb[0].mxu0
        %604 = vmatprep.mubr.bf16.mxu0 0
        %605 = vmatmul.mubr.bf16.gmra.mrb[0].mxu0 %v394
        %v606 = vpop.f32.mrb[0].mxu0
        %v607 = vadd.f32 %v314, %v606
        %v608 = vpop.f32.mrb[0].mxu0
        %v609 = vpop.f32.mrb[0].mxu0
        %v610 = vadd.f32 %v314, %v609
        %v611 = vpop.f32.mrb[0].mxu0
        %612 = vmatprep.mubr.bf16.mxu0 0
        %613 = vmatmul.mubr.bf16.gmra.mrb[0].mxu0 %v395
        %v614 = vpop.f32.mrb[0].mxu0
        %v615 = vadd.f32 %v314, %v614
        %v616 = vpop.f32.mrb[0].mxu0
        %v617 = vpop.f32.mrb[0].mxu0
        %v618 = vadd.f32 %v314, %v617
        %v619 = vpop.f32.mrb[0].mxu0
        %620 = vdwg.mxu0
        %v621 = vmax.f32 %v495, 0.0
        %v622 = vmax.f32 %v498, 0.0
        %v623 = vmax.f32 %v503, 0.0
        %v624 = vmax.f32 %v506, 0.0
        %v625 = vmax.f32 %v511, 0.0
        %v626 = vmax.f32 %v514, 0.0
        %v627 = vmax.f32 %v519, 0.0
        %v628 = vmax.f32 %v522, 0.0
        %v629 = vmax.f32 %v527, 0.0
        %v630 = vmax.f32 %v530, 0.0
        %v631 = vmax.f32 %v535, 0.0
        %v632 = vmax.f32 %v538, 0.0
        %v633 = vmax.f32 %v543, 0.0
        %v634 = vmax.f32 %v546, 0.0
        %v635 = vmax.f32 %v551, 0.0
        %v636 = vmax.f32 %v554, 0.0
        %v637 = vmax.f32 %v559, 0.0
        %v638 = vmax.f32 %v562, 0.0
        %v639 = vmax.f32 %v567, 0.0
        %v640 = vmax.f32 %v570, 0.0
        %v641 = vmax.f32 %v575, 0.0
        %v642 = vmax.f32 %v578, 0.0
        %v643 = vmax.f32 %v583, 0.0
        %v644 = vmax.f32 %v586, 0.0
        %v645 = vmax.f32 %v591, 0.0
        %v646 = vmax.f32 %v594, 0.0
        %v647 = vmax.f32 %v599, 0.0
        %v648 = vmax.f32 %v602, 0.0
        %v649 = vmax.f32 %v607, 0.0
        %v650 = vmax.f32 %v610, 0.0
        %v651 = vmax.f32 %v615, 0.0
        %v652 = vmax.f32 %v618, 0.0
        %v653 = vpack.c.bf16 %v622, %v621
        %v654 = vpack.c.bf16 %v624, %v623
        %v655 = vpack.c.bf16 %v626, %v625
        %v656 = vpack.c.bf16 %v628, %v627
        %v657 = vpack.c.bf16 %v630, %v629
        %v658 = vpack.c.bf16 %v632, %v631
        %v659 = vpack.c.bf16 %v634, %v633
        %v660 = vpack.c.bf16 %v636, %v635
        %v661 = vpack.c.bf16 %v638, %v637
        %v662 = vpack.c.bf16 %v640, %v639
        %v663 = vpack.c.bf16 %v642, %v641
        %v664 = vpack.c.bf16 %v644, %v643
        %v665 = vpack.c.bf16 %v646, %v645
        %v666 = vpack.c.bf16 %v648, %v647
        %v667 = vpack.c.bf16 %v650, %v649
        %v668 = vpack.c.bf16 %v652, %v651
        %v685 = vunpack.c.l.b16 %v653
        %v686 = vunpack.c.h.b16 %v653
        %v687 = vunpack.c.l.b16 %v654
        %v688 = vunpack.c.h.b16 %v654
        %v689 = vunpack.c.l.b16 %v655
        %v690 = vunpack.c.h.b16 %v655
        %v691 = vunpack.c.l.b16 %v656
        %v692 = vunpack.c.h.b16 %v656
        %v693 = vunpack.c.l.b16 %v657
        %v694 = vunpack.c.h.b16 %v657
        %v695 = vunpack.c.l.b16 %v658
        %v696 = vunpack.c.h.b16 %v658
        %v697 = vunpack.c.l.b16 %v659
        %v698 = vunpack.c.h.b16 %v659
        %v699 = vunpack.c.l.b16 %v660
        %v700 = vunpack.c.h.b16 %v660
        %v701 = vunpack.c.l.b16 %v661
        %v702 = vunpack.c.h.b16 %v661
        %v703 = vunpack.c.l.b16 %v662
        %v704 = vunpack.c.h.b16 %v662
        %v705 = vunpack.c.l.b16 %v663
        %v706 = vunpack.c.h.b16 %v663
        %v707 = vunpack.c.l.b16 %v664
        %v708 = vunpack.c.h.b16 %v664
        %v709 = vunpack.c.l.b16 %v665
        %v710 = vunpack.c.h.b16 %v665
        %v711 = vunpack.c.l.b16 %v666
        %v712 = vunpack.c.h.b16 %v666
        %v713 = vunpack.c.l.b16 %v667
        %v714 = vunpack.c.h.b16 %v667
        %v715 = vunpack.c.l.b16 %v668
        %v716 = vunpack.c.h.b16 %v668
        %v717 = vpack.c.b16 %v685, %v685
        %v718 = vpack.c.b16 %v686, %v686
        %v719 = vpack.c.b16 %v687, %v687
        %v720 = vpack.c.b16 %v688, %v688
        %v721 = vpack.c.b16 %v689, %v689
        %v722 = vpack.c.b16 %v690, %v690
        %v723 = vpack.c.b16 %v691, %v691
        %v724 = vpack.c.b16 %v692, %v692
        %v725 = vpack.c.b16 %v693, %v693
        %v726 = vpack.c.b16 %v694, %v694
        %v727 = vpack.c.b16 %v695, %v695
        %v728 = vpack.c.b16 %v696, %v696
        %v729 = vpack.c.b16 %v697, %v697
        %v730 = vpack.c.b16 %v698, %v698
        %v731 = vpack.c.b16 %v699, %v699
        %v732 = vpack.c.b16 %v700, %v700
        %v733 = vpack.c.b16 %v701, %v701
        %v734 = vpack.c.b16 %v702, %v702
        %v735 = vpack.c.b16 %v703, %v703
        %v736 = vpack.c.b16 %v704, %v704
        %v737 = vpack.c.b16 %v705, %v705
        %v738 = vpack.c.b16 %v706, %v706
        %v739 = vpack.c.b16 %v707, %v707
        %v740 = vpack.c.b16 %v708, %v708
        %v741 = vpack.c.b16 %v709, %v709
        %v742 = vpack.c.b16 %v710, %v710
        %v743 = vpack.c.b16 %v711, %v711
        %v744 = vpack.c.b16 %v712, %v712
        %v745 = vpack.c.b16 %v713, %v713
        %v746 = vpack.c.b16 %v714, %v714
        %v747 = vpack.c.b16 %v715, %v715
        %v748 = vpack.c.b16 %v716, %v716
        %781 = vst [vmem:[%s257] sm:$0xf] %v717
        %782 = vst [vmem:[%s257 + $0x4] sm:$0xf] %v718
        %783 = vst [vmem:[%s257 + $0x8] sm:$0xf] %v719
        %784 = vst [vmem:[%s257 + $0xc] sm:$0xf] %v720
        %785 = vst [vmem:[%s257 + $0x10] sm:$0xf] %v721
        %786 = vst [vmem:[%s257 + $0x14] sm:$0xf] %v722
        %787 = vst [vmem:[%s257 + $0x18] sm:$0xf] %v723
        %788 = vst [vmem:[%s257 + $0x1c] sm:$0xf] %v724
        %789 = vst [vmem:[%s257 + $0x20] sm:$0xf] %v725
        %790 = vst [vmem:[%s257 + $0x24] sm:$0xf] %v726
        %791 = vst [vmem:[%s257 + $0x28] sm:$0xf] %v727
        %792 = vst [vmem:[%s257 + $0x2c] sm:$0xf] %v728
        %793 = vst [vmem:[%s257 + $0x30] sm:$0xf] %v729
        %794 = vst [vmem:[%s257 + $0x34] sm:$0xf] %v730
        %795 = vst [vmem:[%s257 + $0x38] sm:$0xf] %v731
        %796 = vst [vmem:[%s257 + $0x3c] sm:$0xf] %v732
        %797 = vst [vmem:[%s257 + $0x40] sm:$0xf] %v733
        %798 = vst [vmem:[%s257 + $0x44] sm:$0xf] %v734
        %799 = vst [vmem:[%s257 + $0x48] sm:$0xf] %v735
        %800 = vst [vmem:[%s257 + $0x4c] sm:$0xf] %v736
        %801 = vst [vmem:[%s257 + $0x50] sm:$0xf] %v737
        %802 = vst [vmem:[%s257 + $0x54] sm:$0xf] %v738
        %803 = vst [vmem:[%s257 + $0x58] sm:$0xf] %v739
        %804 = vst [vmem:[%s257 + $0x5c] sm:$0xf] %v740
        %805 = vst [vmem:[%s257 + $0x60] sm:$0xf] %v741
        %806 = vst [vmem:[%s257 + $0x64] sm:$0xf] %v742
        %807 = vst [vmem:[%s257 + $0x68] sm:$0xf] %v743
        %808 = vst [vmem:[%s257 + $0x6c] sm:$0xf] %v744
        %809 = vst [vmem:[%s257 + $0x70] sm:$0xf] %v745
        %810 = vst [vmem:[%s257 + $0x74] sm:$0xf] %v746
        %811 = vst [vmem:[%s257 + $0x78] sm:$0xf] %v747
        %812 = vst [vmem:[%s257 + $0x7c] sm:$0xf] %v748
        %s813 = sand.u32 %s132, 1
        %s814 = scalar_lea.sflag [#allocation4], %s813
        %s815 = sand.u32 %s132, 1
        %s816 = smul.addr %s815, 128
        %s817 = scalar_lea.vmem [#allocation8], %s816
        // Predicated region
        $region45: #{repvgg_forward_nchw.1} parent=31 // pred_check
          %p818 = pneg %p142
        $region46: #{repvgg_forward_nchw.1} parent=31 // pred_check_branch
          %820 = sbr.rel (%p818) target = $region48
        $region47: #{repvgg_forward_nchw.1} parent=31 // pred_region
          %s821 = smul.u32 16, %s28
          %s823 = ssub.s32 2048, 2048
          %824 = vsyncadd %s814, %s823
          %s825 = smul.addr %s821, 2
          %s826 = sadd.s32 %s27, %s825
          %s827 = smul.addr %s26, 32
          %s828 = sadd.s32 %s826, %s827
          %s829 = smul.addr %s828, 64
          %s830 = scalar_lea.hbm %s3, %s829
          %s831 = sshll.u32 %s817, 4
          %s832 = int_to_ptr.vmem [resolvable:$true] %s831
          %837 = dma.vmem_to_hbm [thread:$0]  %s832, 2048, %s830, %s814, 64, 64, 4
        $region48: #{repvgg_forward_nchw.1} parent=31 // pred_fallthru
          _
      $region32: #{repvgg_forward_nchw.1} parent=5 // pred_fallthru
        _
      %p838 = scmp.le.s32.totalorder 2, %s16
      // Predicated region
      $region49: #{repvgg_forward_nchw.1} parent=5 // pred_check
        %p839 = pneg %p838
      $region50: #{repvgg_forward_nchw.1} parent=5 // pred_check_branch
        %841 = sbr.rel (%p839) target = $region52
      $region51: #{repvgg_forward_nchw.1} parent=5 // pred_region
        %s842 = ssub.s32 %s16, 2
        // Predicated region
        $region53: #{repvgg_forward_nchw.1} parent=51 // pred_check
          %p843 = pneg %p148
        $region54: #{repvgg_forward_nchw.1} parent=51 // pred_check_branch
          %845 = sbr.rel (%p843) target = $region56
        $region55: #{repvgg_forward_nchw.1} parent=51 // pred_region
          %s846 = sand.u32 %s133, 1
          %s847 = scalar_lea.sflag [#allocation4], %s846
          %s848 = sand.u32 %s133, 1
          %s849 = smul.addr %s848, 128
          %s850 = scalar_lea.vmem [#allocation8], %s849
          %851 = dma.done %s847, 2048
        $region56: #{repvgg_forward_nchw.1} parent=51 // pred_fallthru
          _
      $region52: #{repvgg_forward_nchw.1} parent=5 // pred_fallthru
        _
    $region6: #{repvgg_forward_nchw.1} parent=1 // loop_footer
      %s20 = sadd.s32 1, %s16
    $region7: #{repvgg_forward_nchw.1} parent=1 // loop_footer_branch
      %15 = sbr.rel target = $region3
    $region8: #{repvgg_forward_nchw.1} parent=1 // loop_exit
      _
    %852 = vsyncpa [#allocation3], 1
    %s853 = scalar_lea.sflag [#allocation3], 1
    %854 = vsyncpa %s853, 1
    %855 = vsyncpa [#allocation6], 1
    %856 = vsyncpa [#allocation4], 1
    %s857 = scalar_lea.sflag [#allocation4], 1
    %858 = vsyncpa %s857, 1

</llo_original>
